<compile_context>
chip_gen: v6e
topology: v6e:2x2x1
jax: 0.10.0
libtpu: 0.0.40
codegen_flags: <defaults>
</compile_context>

<pallas_src>
import jax
import jax.numpy as jnp
from jax.experimental import pallas as pl
from jax.experimental.pallas import tpu as pltpu


def _cdiv(a, b):
    return -(-a // b)


# -------------------------- Pallas kernel --------------------------------

def _layer_scale_kernel(x_ref, gamma_ref, out_ref):
    # x_ref:     (brow, bhw)  rows = flattened (N, C), lanes = flattened (H, W)
    # gamma_ref: (brow, 1)    per-row (i.e. per-channel) scale
    out_ref[...] = x_ref[...] * gamma_ref[...]


# -------------------------- wrapper ---------------------------------------

def layer_scale_2d(x_nchw, gamma, *, vmem_limit_bytes=32 << 20, inplace=False):
    """x_nchw: (N, C, H, W); gamma: (C,) -> (N, C, H, W), x * gamma per channel."""
    N, C, H, W = x_nchw.shape
    rows, HW = N * C, H * W

    x = x_nchw.reshape(rows, HW)                      # contiguous view, no copy
    # NOTE: gamma is cast to x.dtype (PyTorch would promote bf16*f32 -> f32);
    # acceptable for LayerScale magnitudes.
    g = jnp.broadcast_to(gamma.astype(x.dtype).reshape(1, C), (N, C)).reshape(rows, 1)

    itemsize = jnp.dtype(x.dtype).itemsize
    sub = 8 * max(1, 4 // itemsize)                   # sublane packing: f32=8, bf16=16, int8=32

    # Per-block budget: the pipeline holds 2 double-buffered input blocks and
    # 2 output blocks; keep ~20% headroom inside the scoped-VMEM limit.
    block_budget = int(vmem_limit_bytes * 0.8) // 4

    # ---- lane (H*W) tile: keep it a multiple of 128 (unmasked stores) ----
    if HW % 128 == 0:
        bhw = HW
        while sub * bhw * itemsize > block_budget and bhw % 256 == 0:
            bhw //= 2
    elif HW <= 128 or rows * HW * itemsize <= block_budget:
        bhw = HW                                      # full extent (allowed: equals array dim)
    else:
        bhw = 128                                     # masked tail block via cdiv grid
        while sub * (2 * bhw) * itemsize <= block_budget and 2 * bhw < HW:
            bhw *= 2

    # ---- row (N*C) tile: multiple of the packing factor (or full extent) ----
    if rows * bhw * itemsize <= block_budget or rows <= sub:
        brow = rows
    else:
        max_rows = max(sub, (block_budget // (bhw * itemsize)) // sub * sub)
        brow = min(max_rows, max(sub, (rows // sub) * sub))

    # ---- grid shaping: >= 2 steps (megacore on v7x), ~8 while blocks stay big ----
    while True:
        steps = _cdiv(rows, brow) * _cdiv(HW, bhw)
        if steps >= 8:
            break
        if steps >= 2 and brow * bhw * itemsize <= (512 << 10):
            break
        if bhw % 256 == 0:
            bhw //= 2
        elif brow % (2 * sub) == 0:
            brow //= 2
        else:
            break

    n_row, n_hw = _cdiv(rows, brow), _cdiv(HW, bhw)

    # Put the larger axis first so megacore sharding always has >= 2 blocks on
    # grid dim 0 (both are "parallel": order independent).
    if n_hw > n_row:
        grid = (n_hw, n_row)
        x_map = lambda j, i: (i, j)
        g_map = lambda j, i: (i, 0)
    else:
        grid = (n_row, n_hw)
        x_map = lambda i, j: (i, j)
        g_map = lambda i, j: (i, 0)

    # Explicit scoped-VMEM limit: 2x in + 2x out blocks + 2x gamma tiles
    # (gamma pads to 128 lanes), plus ~30% headroom.
    block_bytes = brow * bhw * itemsize
    gamma_block_bytes = _cdiv(brow, 8) * 8 * 128 * itemsize
    vmem_need = 4 * block_bytes + 2 * gamma_block_bytes
    vmem_limit = max(int(vmem_limit_bytes), int(vmem_need * 1.3))

    out = pl.pallas_call(
        _layer_scale_kernel,
        out_shape=jax.ShapeDtypeStruct((rows, HW), x.dtype),
        grid=grid,
        in_specs=[
            pl.BlockSpec((brow, bhw), x_map),
            pl.BlockSpec((brow, 1), g_map),
        ],
        out_specs=pl.BlockSpec((brow, bhw), x_map),
        compiler_params=pltpu.CompilerParams(
            dimension_semantics=("parallel", "parallel"),
            vmem_limit_bytes=vmem_limit),
        cost_estimate=pl.CostEstimate(
            flops=rows * HW,
            bytes_accessed=2 * rows * HW * itemsize + rows * itemsize,
            transcendentals=0),
        input_output_aliases=({0: 0} if inplace else {}),
    )(x, g)

    return out.reshape(N, C, H, W)


# -------------------------- main ------------------------------------------

if __name__ == "__main__":
    key = jax.random.PRNGKey(0)
    kx, kg, kx2 = jax.random.split(key, 3)

    # Primary config: NCHW feature map, matches the module's typical use.
    N, C, H, W = 2, 4, 16, 16
    x = jax.random.normal(kx, (N, C, H, W), jnp.float32)

    gamma_init = 1e-5 * jnp.ones((C,), jnp.float32)            # module default init
    gamma_rand = 0.5 * jax.random.normal(kg, (C,), jnp.float32)

    for gamma in (gamma_init, gamma_rand):
        out = jax.block_until_ready(layer_scale_2d(x, gamma))
        ref = x * gamma.reshape(1, C, 1, 1)
        assert out.shape == (N, C, H, W), out.shape
        err = float(jnp.max(jnp.abs(out - ref)))
        assert err <= 1e-6, f"max abs error vs reference: {err}"

    # Odd spatial / channel sizes: exercises the non-128-multiple lane path
    # and non-multiple-of-8 row path (masked tail blocks).
    N2, C2, H2, W2 = 2, 6, 10, 13
    x2 = jax.random.normal(kx2, (N2, C2, H2, W2), jnp.float32)
    gamma2 = 1e-5 * jnp.ones((C2,), jnp.float32)
    out2 = jax.block_until_ready(layer_scale_2d(x2, gamma2))
    ref2 = x2 * gamma2.reshape(1, C2, 1, 1)
    err2 = float(jnp.max(jnp.abs(out2 - ref2)))
    assert err2 <= 1e-6, f"max abs error vs reference (odd shapes): {err2}"

    print("KERNEL_OK")
</pallas_src>

<mosaic_0001>
module attributes {stable_mosaic.version = 11 : i64} {
  func.func @_layer_scale_kernel(%arg0: i32, %arg1: i32, %arg2: memref<8x128xf32, #tpu.memory_space<vmem>>, %arg3: memref<8x1xf32, #tpu.memory_space<vmem>>, %arg4: memref<8x128xf32, #tpu.memory_space<vmem>>) attributes {dimension_semantics = [#tpu.dimension_semantics<parallel>, #tpu.dimension_semantics<parallel>], iteration_bounds = array<i64: 2, 1>, scalar_prefetch = 0 : i64, scratch_operands = 0 : i64, tpu.core_type = #tpu.core_type<tc>, window_params = [{transform_indices = @transform_0, window_bounds = array<i64: 8, 128>}, {transform_indices = @transform_1, window_bounds = array<i64: 8, 1>}, {transform_indices = @transform_2, window_bounds = array<i64: 8, 128>}]} {
    %c0 = arith.constant 0 : index
    %c0_0 = arith.constant 0 : index
    %0 = vector.load %arg2[%c0, %c0_0] : memref<8x128xf32, #tpu.memory_space<vmem>>, vector<8x128xf32>
    %c0_1 = arith.constant 0 : index
    %c0_2 = arith.constant 0 : index
    %1 = vector.load %arg3[%c0_1, %c0_2] : memref<8x1xf32, #tpu.memory_space<vmem>>, vector<8x1xf32>
    %2 = vector.broadcast %1 : vector<8x1xf32> to vector<8x128xf32>
    %3 = arith.mulf %0, %2 : vector<8x128xf32>
    %c0_3 = arith.constant 0 : index
    %c0_4 = arith.constant 0 : index
    %4 = vector.load %arg4[%c0_3, %c0_4] : memref<8x128xf32, #tpu.memory_space<vmem>>, vector<8x128xf32>
    tpu.vector_store %arg4[%c0_3, %c0_4], %3 {strides = array<i32>} : memref<8x128xf32, #tpu.memory_space<vmem>>, vector<8x128xf32>,
    return
  }
  func.func @transform_0(%arg0: i32, %arg1: i32) -> (i32, i32) {
    %c0_i32 = arith.constant 0 : i32
    return %arg1, %arg0 : i32, i32
  }
  func.func @transform_1(%arg0: i32, %arg1: i32) -> (i32, i32) {
    %c0_i32 = arith.constant 0 : i32
    %c0_i32_0 = arith.constant 0 : i32
    return %arg1, %c0_i32 : i32, i32
  }
  func.func @transform_2(%arg0: i32, %arg1: i32) -> (i32, i32) {
    %c0_i32 = arith.constant 0 : i32
    return %arg1, %arg0 : i32, i32
  }
}

</mosaic_0001>

<llo_original>
// kernel: tpu_custom_call.1
$region0: #{tpu_custom_call.1}
  #allocation0 [shape = 'u32[]', space=smem, size = 0x4, offset = 0x4, fixed_abs, tag = 'smem constant byte address 0x4 - core index']
  #allocation1 [shape = 'u32[144,128]{1,0:T(1,128)}', space=vmem, size = 0x12000, scoped, tag = 'internal scratch']
  %s0 = inlined_call_operand.hbm [shape: f32[8,256], index: 0, kind: input, shape index: {}]
  %s1 = inlined_call_operand.vmem [shape: f32[8,1], index: 1, kind: input, shape index: {}]
  %s2 = inlined_call_operand.hbm [shape: f32[8,256], index: 2, kind: output, shape index: {}]
  %s3 = sld [smem:[#allocation0]]
  $region45: #{tpu_custom_call.1} parent=0
    _
  %s5 = ssub.s32 1, %s3
  %s6 = scalar_select 0, %s5, %s3
  $region1: #{tpu_custom_call.1} parent=0
    #allocation2 [shape = 'u8[8192]{0}', space=vmem, size = 0x2000, scoped, tag = 'input window, operand 0']
    #allocation3 [shape = 's32[2]{0}', space=sflag, size = 0x8, scoped, tag = 'scoped memory for tpu_custom_call.1']
    #allocation4 [shape = 's32[2]{0}', space=sflag, size = 0x8, scoped, tag = 'scoped memory for tpu_custom_call.1']
    #allocation5 [shape = 'u8[8192]{0}', space=vmem, size = 0x2000, scoped, tag = 'output window, operand 0']
    %7 = vsyncpa [#allocation3], 0
    %s8 = scalar_lea.sflag [#allocation3], 1
    %9 = vsyncpa %s8, 0
    %10 = vsyncpa [#allocation4], 0
    %s11 = scalar_lea.sflag [#allocation4], 1
    %12 = vsyncpa %s11, 0
    loop: start=0, step=1, limit=4
    $region2: #{tpu_custom_call.1} parent=1 // loop_pre_header
      _
    $region3: #{tpu_custom_call.1} parent=1 // loop_header
      %s14 = sphi 0, %s18
      %p15 = scmp.ge.s32.totalorder %s14, 4
      %s21 = sphi 0, %s33
      %s22 = sphi 0, %s29
      %s23 = sphi 0, %s21
      %s24 = sphi 0, %s22
      %s25 = sphi 0, %s23
      %s26 = sphi 0, %s24
      %s38 = sphi 0, %s40
      %s41 = sphi 0, %s38
      %s42 = sphi 0, %s41
      %s58 = sphi 0, %s42
      %s64 = sphi 0, %s66
      %s67 = sphi 0, %s64
      %s68 = sphi 0, %s67
      %s84 = sphi 0, %s68
      %s92 = sphi 0, %s94
      %s95 = sphi 0, %s92
      %s96 = sphi 0, %s95
      %s112 = sphi 0, %s96
    $region4: #{tpu_custom_call.1} parent=1 // loop_header_branch
      %17 = sbr.rel (%p15) target = $region8
    $region5: #{tpu_custom_call.1} parent=1 // loop_body
      %s19 = ssub.s32 %s14, 1
      %s20 = ssub.s32 %s14, 2
      %s27 = sadd.s32 1, %s22
      %p28 = scmp.ge.s32.totalorder %s27, 1
      %s29 = scalar_select %p28, 0, %s27
      %s30 = sadd.s32 1, %s21
      %s31 = scalar_select %p28, %s30, %s21
      %p32 = scmp.ge.s32.totalorder %s31, 2
      %s33 = scalar_select %p32, 0, %s31
      %s34 = ssub.s32 %s22, %s29
      %s35 = ssub.s32 %s21, %s33
      %s36 = sor.u32 %s34, %s35
      %p37 = scmp.eq.s32.totalorder %s36, 0
      %s39 = sadd.s32 %s38, 1
      %s40 = scalar_select %p37, %s38, %s39
      %p43 = pneg %p37
      %p44 = scmp.eq.s32.totalorder %s14, 1
      %p45 = por %p43, %p44
      %p46 = scmp.ne.s32.totalorder %s38, %s41
      %p47 = scmp.eq.s32.totalorder %s14, 0
      %p48 = por %p46, %p47
      %p49 = scmp.ne.s32.totalorder %s38, %s41
      %p50 = scmp.eq.s32.totalorder %s19, 1
      %p51 = por %p49, %p50
      %p52 = scmp.ne.s32.totalorder %s41, %s42
      %p53 = scmp.eq.s32.totalorder %s19, 0
      %p54 = por %p52, %p53
      %p55 = scmp.ne.s32.totalorder %s41, %s42
      %p56 = scmp.eq.s32.totalorder %s20, 1
      %p57 = por %p55, %p56
      %p59 = scmp.ne.s32.totalorder %s42, %s58
      %p60 = scmp.eq.s32.totalorder %s20, 0
      %p61 = por %p59, %p60
      %s62 = ssub.s32 %s22, %s29
      %p63 = scmp.eq.s32.totalorder %s62, 0
      %s65 = sadd.s32 %s64, 1
      %s66 = scalar_select %p63, %s64, %s65
      %p69 = pneg %p63
      %p70 = scmp.eq.s32.totalorder %s14, 1
      %p71 = por %p69, %p70
      %p72 = scmp.ne.s32.totalorder %s64, %s67
      %p73 = scmp.eq.s32.totalorder %s14, 0
      %p74 = por %p72, %p73
      %p75 = scmp.ne.s32.totalorder %s64, %s67
      %p76 = scmp.eq.s32.totalorder %s19, 1
      %p77 = por %p75, %p76
      %p78 = scmp.ne.s32.totalorder %s67, %s68
      %p79 = scmp.eq.s32.totalorder %s19, 0
      %p80 = por %p78, %p79
      %p81 = scmp.ne.s32.totalorder %s67, %s68
      %p82 = scmp.eq.s32.totalorder %s20, 1
      %p83 = por %p81, %p82
      %p85 = scmp.ne.s32.totalorder %s68, %s84
      %p86 = scmp.eq.s32.totalorder %s20, 0
      %p87 = por %p85, %p86
      %s88 = ssub.s32 %s22, %s29
      %s89 = ssub.s32 %s21, %s33
      %s90 = sor.u32 %s88, %s89
      %p91 = scmp.eq.s32.totalorder %s90, 0
      %s93 = sadd.s32 %s92, 1
      %s94 = scalar_select %p91, %s92, %s93
      %p97 = pneg %p91
      %p98 = scmp.eq.s32.totalorder %s14, 1
      %p99 = por %p97, %p98
      %p100 = scmp.ne.s32.totalorder %s92, %s95
      %p101 = scmp.eq.s32.totalorder %s14, 0
      %p102 = por %p100, %p101
      %p103 = scmp.ne.s32.totalorder %s92, %s95
      %p104 = scmp.eq.s32.totalorder %s19, 1
      %p105 = por %p103, %p104
      %p106 = scmp.ne.s32.totalorder %s95, %s96
      %p107 = scmp.eq.s32.totalorder %s19, 0
      %p108 = por %p106, %p107
      %p109 = scmp.ne.s32.totalorder %s95, %s96
      %p110 = scmp.eq.s32.totalorder %s20, 1
      %p111 = por %p109, %p110
      %p113 = scmp.ne.s32.totalorder %s96, %s112
      %p114 = scmp.eq.s32.totalorder %s20, 0
      %p115 = por %p113, %p114
      %p116 = scmp.le.s32.totalorder 1, %s14
      %p117 = scmp.lt.s32.totalorder %s14, 3
      %p118 = pnand %p116, %p117
      %p119 = pneg %p118
      // Predicated region
      $region9: #{tpu_custom_call.1} parent=5 // pred_check
        _
      $region10: #{tpu_custom_call.1} parent=5 // pred_check_branch
        %121 = sbr.rel (%p118) target = $region12
      $region11: #{tpu_custom_call.1} parent=5 // pred_region
        %s122 = ssub.s32 %s14, 1
        // Predicated region
        $region13: #{tpu_custom_call.1} parent=11 // pred_check
          %p123 = pneg %p80
        $region14: #{tpu_custom_call.1} parent=11 // pred_check_branch
          %125 = sbr.rel (%p123) target = $region16
        $region15: #{tpu_custom_call.1} parent=11 // pred_region
          %p126 = scmp.lt.s32.totalorder %s24, 0
          %s127 = scalar_select %p126, %s24, 0
          %s128 = smul.addr %s127, 8
          %s129 = scalar_lea.vmem %s1, %s128
        $region16: #{tpu_custom_call.1} parent=11 // pred_fallthru
          _
      $region12: #{tpu_custom_call.1} parent=5 // pred_fallthru
        _
      %p130 = scmp.lt.s32.totalorder %s14, 2
      // Predicated region
      $region17: #{tpu_custom_call.1} parent=5 // pred_check
        %p131 = pneg %p130
      $region18: #{tpu_custom_call.1} parent=5 // pred_check_branch
        %133 = sbr.rel (%p131) target = $region20
      $region19: #{tpu_custom_call.1} parent=5 // pred_region
        // Predicated region
        $region21: #{tpu_custom_call.1} parent=19 // pred_check
          %p134 = pneg %p48
        $region22: #{tpu_custom_call.1} parent=19 // pred_check_branch
          %136 = sbr.rel (%p134) target = $region24
        $region23: #{tpu_custom_call.1} parent=19 // pred_region
          %s137 = sand.u32 %s38, 1
          %s138 = scalar_lea.sflag [#allocation3], %s137
          %s139 = sand.u32 %s38, 1
          %s140 = smul.addr %s139, 8
          %s141 = scalar_lea.vmem [#allocation2], %s140
          %s143 = ssub.s32 128, 128
          %144 = vsyncadd %s138, %s143
          %s145 = smul.addr %s22, 2
          %s146 = sadd.s32 %s21, %s145
          %s147 = smul.addr %s146, 128
          %s148 = scalar_lea.hbm %s0, %s147
          %s150 = sshll.u32 %s141, 4
          %s151 = int_to_ptr.vmem [resolvable:$true] %s150
          %153 = dma.hbm_to_vmem [thread:$0]  %s148, 128, %s151, %s138
        $region24: #{tpu_custom_call.1} parent=19 // pred_fallthru
          _
      $region20: #{tpu_custom_call.1} parent=5 // pred_fallthru
        _
      %p154 = scmp.le.s32.totalorder 1, %s14
      %p155 = scmp.lt.s32.totalorder %s14, 3
      %p156 = pnand %p154, %p155
      %p157 = pneg %p156
      // Predicated region
      $region25: #{tpu_custom_call.1} parent=5 // pred_check
        _
      $region26: #{tpu_custom_call.1} parent=5 // pred_check_branch
        %159 = sbr.rel (%p156) target = $region28
      $region27: #{tpu_custom_call.1} parent=5 // pred_region
        %s160 = ssub.s32 %s14, 1
        %s161 = sand.u32 %s41, 1
        %s162 = scalar_lea.sflag [#allocation3], %s161
        %s163 = sand.u32 %s41, 1
        %s164 = smul.addr %s163, 8
        %s165 = scalar_lea.vmem [#allocation2], %s164
        // Predicated region
        $region29: #{tpu_custom_call.1} parent=27 // pred_check
          %p166 = pneg %p54
        $region30: #{tpu_custom_call.1} parent=27 // pred_check_branch
          %168 = sbr.rel (%p166) target = $region32
        $region31: #{tpu_custom_call.1} parent=27 // pred_region
          %169 = dma.done %s162, 128
        $region32: #{tpu_custom_call.1} parent=27 // pred_fallthru
          _
        %s170 = sand.u32 %s41, 1
        %s171 = scalar_lea.sflag [#allocation3], %s170
        %s172 = sand.u32 %s41, 1
        %s173 = smul.addr %s172, 8
        %s174 = scalar_lea.vmem [#allocation2], %s173
        %p175 = pneg %p54
        %p176 = pneg %p51
        %p177 = scmp.lt.s32.totalorder %s24, 0
        %s178 = scalar_select %p177, %s24, 0
        %s179 = smul.addr %s178, 8
        %s180 = scalar_lea.vmem %s1, %s179
        %p181 = pneg %p80
        %p182 = pneg %p77
        %p183 = pneg %p108
        %p184 = pneg %p105
        %s185 = sand.u32 %s95, 1
        %s186 = scalar_lea.sflag [#allocation4], %s185
        %s187 = sand.u32 %s95, 1
        %s188 = smul.addr %s187, 8
        %s189 = scalar_lea.vmem [#allocation5], %s188
        %p190 = scmp.lt.s32.totalorder %s24, 0
        %s191 = scalar_select %p190, %s24, 0
        %s192 = smul.addr %s191, 8
        %s193 = scalar_lea.vmem %s1, %s192
        %v194 = vld [vmem:[%s165] sm:$0xff]
        %v195 = vld [vmem:[%s193] sm:$0xff]
        %197 = vset.pattern.permute.xlu0 0
        %198 = vperm.xlu0 %197, %v195
        %v199 = vpop.permute.xlu0 %198
        %v201 = vmul.f32 %v194, %v199
        %202 = vst [vmem:[%s189] sm:$0xff] %v201
        %s203 = sand.u32 %s95, 1
        %s204 = scalar_lea.sflag [#allocation4], %s203
        %s205 = sand.u32 %s95, 1
        %s206 = smul.addr %s205, 8
        %s207 = scalar_lea.vmem [#allocation5], %s206
        // Predicated region
        $region33: #{tpu_custom_call.1} parent=27 // pred_check
          %p208 = pneg %p105
        $region34: #{tpu_custom_call.1} parent=27 // pred_check_branch
          %210 = sbr.rel (%p208) target = $region36
        $region35: #{tpu_custom_call.1} parent=27 // pred_region
          %s212 = ssub.s32 128, 128
          %213 = vsyncadd %s204, %s212
          %s214 = smul.addr %s24, 2
          %s215 = sadd.s32 %s23, %s214
          %s216 = smul.addr %s215, 128
          %s217 = scalar_lea.hbm %s2, %s216
          %s219 = sshll.u32 %s207, 4
          %s220 = int_to_ptr.vmem [resolvable:$true] %s219
          %222 = dma.vmem_to_hbm [thread:$0]  %s220, 128, %s217, %s204
        $region36: #{tpu_custom_call.1} parent=27 // pred_fallthru
          _
      $region28: #{tpu_custom_call.1} parent=5 // pred_fallthru
        _
      %p223 = scmp.le.s32.totalorder 2, %s14
      // Predicated region
      $region37: #{tpu_custom_call.1} parent=5 // pred_check
        %p224 = pneg %p223
      $region38: #{tpu_custom_call.1} parent=5 // pred_check_branch
        %226 = sbr.rel (%p224) target = $region40
      $region39: #{tpu_custom_call.1} parent=5 // pred_region
        %s227 = ssub.s32 %s14, 2
        // Predicated region
        $region41: #{tpu_custom_call.1} parent=39 // pred_check
          %p228 = pneg %p111
        $region42: #{tpu_custom_call.1} parent=39 // pred_check_branch
          %230 = sbr.rel (%p228) target = $region44
        $region43: #{tpu_custom_call.1} parent=39 // pred_region
          %s231 = sand.u32 %s96, 1
          %s232 = scalar_lea.sflag [#allocation4], %s231
          %s233 = sand.u32 %s96, 1
          %s234 = smul.addr %s233, 8
          %s235 = scalar_lea.vmem [#allocation5], %s234
          %236 = dma.done %s232, 128
        $region44: #{tpu_custom_call.1} parent=39 // pred_fallthru
          _
      $region40: #{tpu_custom_call.1} parent=5 // pred_fallthru
        _
    $region6: #{tpu_custom_call.1} parent=1 // loop_footer
      %s18 = sadd.s32 1, %s14
    $region7: #{tpu_custom_call.1} parent=1 // loop_footer_branch
      %13 = sbr.rel target = $region3
    $region8: #{tpu_custom_call.1} parent=1 // loop_exit
      _
    %237 = vsyncpa [#allocation3], 1
    %s238 = scalar_lea.sflag [#allocation3], 1
    %239 = vsyncpa %s238, 1
    %240 = vsyncpa [#allocation4], 1
    %s241 = scalar_lea.sflag [#allocation4], 1
    %242 = vsyncpa %s241, 1

</llo_original>
